<compile_context>
chip_gen: v6e
topology: v6e:2x2x1
jax: 0.10.0
libtpu: 0.0.40
codegen_flags: <defaults>
</compile_context>

<pallas_src>
import functools

import jax
import jax.numpy as jnp
from jax.experimental import pallas as pl
from jax.experimental.pallas import tpu as pltpu

MARGIN = 0.3


def _round_up(x, m):
    return ((x + m - 1) // m) * m


def _vmem_capacity_bytes():
    try:
        info = pltpu.get_tpu_info()
        return int(getattr(info, "vmem_capacity_bytes", 64 * 1024 * 1024))
    except Exception:  # pragma: no cover - be conservative off-TPU
        return 64 * 1024 * 1024


def _pick_tiles(n, d_pad, itemsize):
    """Pick (TM, TN) row/column tiles.

    TM: as large as possible (fewer HBM re-reads of the gallery tiles), but
    leave >= 2 row blocks so both v7x TensorCores get work, and stay inside a
    per-generation VMEM budget (generous on 128 MiB v5e/v6e, tight on 64 MiB
    v7x).
    """
    n128 = _round_up(max(n, 1), 128)
    big_vmem = _vmem_capacity_bytes() >= 100 * 1024 * 1024
    tm_cap = 1024 if big_vmem else 512
    budget = (40 if big_vmem else 20) * 1024 * 1024

    tm = 128
    while tm * 2 <= min(tm_cap, n128 // 2):   # keep >= 2 row blocks (megacore)
        tm *= 2
    tn = 256 if n128 >= 256 else 128

    def tile_bytes(tm_, tn_):                 # double-buffered embedding tiles
        return 2 * (tm_ + tn_) * d_pad * itemsize

    while tm > 128 and tile_bytes(tm, tn) > budget:
        tm //= 2
    while tn > 128 and tile_bytes(tm, tn) > budget:
        tn //= 2
    return tm, tn


def _triplet_kernel(emb_r_ref, emb_c_ref, sq_r_ref, sq_c_ref,
                    tgt_r_ref, tgt_c_ref, out_ref,
                    hp_acc, hn_acc, *, n_true, n_pad, margin):
    i = pl.program_id(0)
    j = pl.program_id(1)
    tm = tgt_r_ref.shape[0]
    tn = tgt_c_ref.shape[1]

    @pl.when(j == 0)
    def _():
        hp_acc[...] = jnp.full(hp_acc.shape, -jnp.inf, jnp.float32)
        hn_acc[...] = jnp.full(hn_acc.shape, jnp.inf, jnp.float32)

    # Gram tile on the MXU; contract the feature (last/lane) dim of both tiles
    # -> no explicit transpose/relayout of the column tile.
    gram = jax.lax.dot_general(
        emb_r_ref[...], emb_c_ref[...],
        dimension_numbers=(((1,), (1,)), ((), ())),
        preferred_element_type=jnp.float32)                      # (TM, TN) f32

    # Half squared distance minus the per-row constant:
    #   t = 0.5*||x_j||^2 - <x_i,x_j>;  d^2 = ||x_i||^2 + 2*t  (monotone in t)
    # The 0.5 scale is applied to the tiny (1, TN) block only.
    t = 0.5 * sq_c_ref[...] - gram                               # (TM, TN)

    same = tgt_r_ref[...] == tgt_c_ref[...]                      # (TM, TN) bool
    if n_true < n_pad:                                           # static check
        col_ids = jax.lax.broadcasted_iota(jnp.int32, (1, tn), 1) + j * tn
        col_valid = col_ids < n_true                             # mask pad cols
        pos = same & col_valid
        neg = (~same) & col_valid
    else:
        pos = same
        neg = ~same

    pos_vals = jnp.where(pos, t, -jnp.inf)
    neg_vals = jnp.where(neg, t, jnp.inf)

    # Deferred cross-lane reduction: element-wise max/min against the (TM,128)
    # accumulators over 128-aligned static lane slices (pure VPU); the single
    # XLU reduce happens once per row block in the finalize branch below.
    hp = hp_acc[...]
    hn = hn_acc[...]
    for c in range(tn // 128):
        sl = slice(c * 128, (c + 1) * 128)
        hp = jnp.maximum(hp, pos_vals[:, sl])
        hn = jnp.minimum(hn, neg_vals[:, sl])
    hp_acc[...] = hp
    hn_acc[...] = hn

    @pl.when(j == pl.num_programs(1) - 1)
    def _():
        sq_r = sq_r_ref[...]                                     # (TM, 1)
        hp_t = jnp.max(hp_acc[...], axis=1, keepdims=True)       # one XLU reduce
        hn_t = jnp.min(hn_acc[...], axis=1, keepdims=True)       # per row block
        # clamp(1e-12).sqrt() commutes with max/min (monotone), so applying it
        # to the selected squared distances matches the PyTorch reference.
        hard_p = jnp.sqrt(jnp.maximum(sq_r + 2.0 * hp_t, 1e-12))
        hard_n = jnp.sqrt(jnp.maximum(sq_r + 2.0 * hn_t, 1e-12))
        per_row = jnp.maximum(hard_p - hard_n + margin, 0.0)
        if n_true < n_pad:
            row_ids = jax.lax.broadcasted_iota(jnp.int32, (tm, 1), 0) + i * tm
            per_row = jnp.where(row_ids < n_true, per_row, 0.0)  # mask pad rows
        # lane/sublane-dense partial-sum slab for this row block
        out_ref[...] = jnp.full(out_ref.shape, jnp.sum(per_row), jnp.float32)


def triplet_loss(emb, targets, margin=MARGIN, mxu_dtype=None):
    """emb: (N, D) float, targets: (N,) int -> scalar float32 loss.

    mxu_dtype: dtype of the embedding tiles fed to the MXU (e.g. jnp.bfloat16
      to halve HBM traffic / MXU passes when emb is float32).  Defaults to
      emb.dtype.  Squared norms and all mining arithmetic stay float32.
    """
    n, d = emb.shape
    kern_dtype = jnp.dtype(mxu_dtype) if mxu_dtype is not None else jnp.dtype(emb.dtype)
    itemsize = kern_dtype.itemsize

    d_pad = _round_up(max(d, 1), 128)
    tm, tn = _pick_tiles(n, d_pad, itemsize)
    n_pad = _round_up(max(n, 1), max(tm, tn))
    g_rows = n_pad // tm
    g_cols = n_pad // tn

    # Pad: zero rows/features (zeros contribute nothing to norms/dot products),
    # sentinel targets for padded rows; padded rows/cols are masked in-kernel
    # (only when padding actually exists).
    emb_p = jnp.zeros((n_pad, d_pad), kern_dtype).at[:n, :d].set(
        emb.astype(kern_dtype))
    tgt_p = jnp.full((n_pad,), -1, jnp.int32).at[:n].set(targets.astype(jnp.int32))

    # Squared norms with f32 accumulation, without materializing a full f32
    # copy of emb.
    sq = jnp.einsum('nd,nd->n', emb, emb, preferred_element_type=jnp.float32)
    sq_p = jnp.zeros((n_pad,), jnp.float32).at[:n].set(sq)
    sq_row = sq_p.reshape(n_pad, 1)
    sq_col = sq_p.reshape(1, n_pad)
    tgt_row = tgt_p.reshape(n_pad, 1)
    tgt_col = tgt_p.reshape(1, n_pad)

    kernel = functools.partial(_triplet_kernel, n_true=n, n_pad=n_pad,
                               margin=float(margin))

    # VMEM footprint: double-buffered embedding tiles dominate.  Size the
    # scoped limit from the real footprint (fits v7x's 64 MiB part).
    footprint = 2 * (tm + tn) * d_pad * itemsize          # emb row/col tiles x2
    footprint += 2 * tm * 128 * 4                         # hp/hn accumulators
    footprint += 2 * 2 * (tm + tn) * 4 * 2                # sq/tgt edge blocks x2
    footprint += 2 * 8 * 128 * 4                          # output slab x2
    vmem_limit = int(min(max(footprint + (4 << 20), 16 << 20), 56 << 20))

    partials = pl.pallas_call(
        kernel,
        out_shape=jax.ShapeDtypeStruct((g_rows, 8, 128), jnp.float32),
        grid_spec=pltpu.PrefetchScalarGridSpec(
            num_scalar_prefetch=0,
            grid=(g_rows, g_cols),
            in_specs=[
                pl.BlockSpec((tm, d_pad), lambda i, j: (i, 0)),   # anchor rows
                pl.BlockSpec((tn, d_pad), lambda i, j: (j, 0)),   # gallery cols
                pl.BlockSpec((tm, 1), lambda i, j: (i, 0)),       # ||x_i||^2
                pl.BlockSpec((1, tn), lambda i, j: (0, j)),       # ||x_j||^2
                pl.BlockSpec((tm, 1), lambda i, j: (i, 0)),       # targets rows
                pl.BlockSpec((1, tn), lambda i, j: (0, j)),       # targets cols
            ],
            out_specs=pl.BlockSpec((1, 8, 128), lambda i, j: (i, 0, 0)),
            scratch_shapes=[
                pltpu.VMEM((tm, 128), jnp.float32),   # deferred hardest-positive
                pltpu.VMEM((tm, 128), jnp.float32),   # deferred hardest-negative
            ],
        ),
        compiler_params=pltpu.CompilerParams(
            dimension_semantics=("parallel", "arbitrary"),
            vmem_limit_bytes=vmem_limit,
        ),
    )(emb_p, emb_p, sq_row, sq_col, tgt_row, tgt_col)

    return jnp.sum(partials[:, 0, 0]) / jnp.float32(n)


def _triplet_loss_ref(emb, targets, margin=MARGIN):
    """Pure-JAX reference mirroring the PyTorch forward (dist=False path)."""
    x = emb.astype(jnp.float32)
    sq = jnp.sum(x * x, axis=1, keepdims=True)
    dist = sq + sq.T - 2.0 * jnp.dot(x, x.T, precision=jax.lax.Precision.HIGHEST)
    dist = jnp.sqrt(jnp.maximum(dist, 1e-12))
    sim = (targets[:, None] == targets[None, :]).astype(jnp.float32)
    hard_p = jnp.max(dist - 9999.0 * (1.0 - sim), axis=1)
    hard_n = jnp.min(dist + 9999.0 * sim, axis=1)
    return jnp.mean(jnp.maximum(hard_p - hard_n + margin, 0.0))


if __name__ == "__main__":
    key = jax.random.PRNGKey(0)
    k1, k2, k3, k4 = jax.random.split(key, 4)

    # Tiny re-ID style batch (single tile after padding).
    emb = jax.random.normal(k1, (8, 32), dtype=jnp.float32)
    targets = jax.random.randint(k2, (8,), 0, 3, dtype=jnp.int32)
    loss = jax.block_until_ready(triplet_loss(emb, targets))
    ref = jax.block_until_ready(_triplet_loss_ref(emb, targets))
    assert jnp.allclose(loss, ref, atol=1e-3, rtol=1e-3), (loss, ref)

    # Larger batch exercising the tiled grid and row/col padding masks.
    emb2 = jax.random.normal(k3, (320, 48), dtype=jnp.float32)
    targets2 = jax.random.randint(k4, (320,), 0, 5, dtype=jnp.int32)
    loss2 = jax.block_until_ready(triplet_loss(emb2, targets2))
    ref2 = jax.block_until_ready(_triplet_loss_ref(emb2, targets2))
    assert jnp.allclose(loss2, ref2, atol=1e-3, rtol=1e-3), (loss2, ref2)

    # bf16 MXU-tile path (halved HBM traffic / fast MXU); loose tolerance since
    # the gram matrix is computed in bf16.
    loss3 = jax.block_until_ready(
        triplet_loss(emb2, targets2, mxu_dtype=jnp.bfloat16))
    assert jnp.allclose(loss3, ref2, atol=5e-2, rtol=5e-2), (loss3, ref2)

    print("KERNEL_OK")
</pallas_src>

<mosaic_0001>
module attributes {stable_mosaic.version = 11 : i64} {
  func.func @_triplet_kernel(%arg0: i32, %arg1: i32, %arg2: memref<128x128xf32, #tpu.memory_space<vmem>>, %arg3: memref<128x128xf32, #tpu.memory_space<vmem>>, %arg4: memref<128x1xf32, #tpu.memory_space<vmem>>, %arg5: memref<1x128xf32, #tpu.memory_space<vmem>>, %arg6: memref<128x1xi32, #tpu.memory_space<vmem>>, %arg7: memref<1x128xi32, #tpu.memory_space<vmem>>, %arg8: memref<1x8x128xf32, #tpu.memory_space<vmem>>, %arg9: memref<128x128xf32, #tpu.memory_space<vmem>>, %arg10: memref<128x128xf32, #tpu.memory_space<vmem>>) attributes {dimension_semantics = [#tpu.dimension_semantics<parallel>, #tpu.dimension_semantics<arbitrary>], iteration_bounds = array<i64: 1, 1>, scalar_prefetch = 0 : i64, scratch_operands = 2 : i64, tpu.core_type = #tpu.core_type<tc>, window_params = [{transform_indices = @transform_0, window_bounds = array<i64: 128, 128>}, {transform_indices = @transform_1, window_bounds = array<i64: 128, 128>}, {transform_indices = @transform_2, window_bounds = array<i64: 128, 1>}, {transform_indices = @transform_3, window_bounds = array<i64: 1, 128>}, {transform_indices = @transform_4, window_bounds = array<i64: 128, 1>}, {transform_indices = @transform_5, window_bounds = array<i64: 1, 128>}, {transform_indices = @transform_6, window_bounds = array<i64: 1, 8, 128>}]} {
    %c0_i32 = arith.constant 0 : i32
    %0 = arith.cmpi eq, %arg1, %c0_i32 : i32
    %1 = arith.extui %0 : i1 to i32
    %c0_i32_0 = arith.constant 0 : i32
    %2 = arith.cmpi ne, %1, %c0_i32_0 : i32
    scf.if %2 {
      %cst_24 = arith.constant 0xFF800000 : f32
      %40 = vector.broadcast %cst_24 : f32 to vector<128x128xf32>
      %c0_25 = arith.constant 0 : index
      %c0_26 = arith.constant 0 : index
      %41 = vector.load %arg9[%c0_25, %c0_26] : memref<128x128xf32, #tpu.memory_space<vmem>>, vector<128x128xf32>
      tpu.vector_store %arg9[%c0_25, %c0_26], %40 {strides = array<i32>} : memref<128x128xf32, #tpu.memory_space<vmem>>, vector<128x128xf32>,
      %cst_27 = arith.constant 0x7F800000 : f32
      %42 = vector.broadcast %cst_27 : f32 to vector<128x128xf32>
      %c0_28 = arith.constant 0 : index
      %c0_29 = arith.constant 0 : index
      %43 = vector.load %arg10[%c0_28, %c0_29] : memref<128x128xf32, #tpu.memory_space<vmem>>, vector<128x128xf32>
      tpu.vector_store %arg10[%c0_28, %c0_29], %42 {strides = array<i32>} : memref<128x128xf32, #tpu.memory_space<vmem>>, vector<128x128xf32>,
    } else {
    }
    %c0 = arith.constant 0 : index
    %c0_1 = arith.constant 0 : index
    %3 = vector.load %arg2[%c0, %c0_1] : memref<128x128xf32, #tpu.memory_space<vmem>>, vector<128x128xf32>
    %c0_2 = arith.constant 0 : index
    %c0_3 = arith.constant 0 : index
    %4 = vector.load %arg3[%c0_2, %c0_3] : memref<128x128xf32, #tpu.memory_space<vmem>>, vector<128x128xf32>
    %cst = arith.constant dense<0.000000e+00> : vector<128x128xf32>
    %5 = tpu.matmul %3, %4, %cst {dimension_numbers = #tpu.dot_dimension_numbers<[1], [1], [0], [0], [0, 0, 1, 0], [], []>} : vector<128x128xf32>, vector<128x128xf32>, vector<128x128xf32> -> vector<128x128xf32>
    %c0_4 = arith.constant 0 : index
    %c0_5 = arith.constant 0 : index
    %6 = vector.load %arg5[%c0_4, %c0_5] : memref<1x128xf32, #tpu.memory_space<vmem>>, vector<1x128xf32>
    %cst_6 = arith.constant 5.000000e-01 : f32
    %7 = vector.broadcast %cst_6 : f32 to vector<1x128xf32>
    %8 = arith.mulf %7, %6 : vector<1x128xf32>
    %9 = vector.broadcast %8 : vector<1x128xf32> to vector<128x128xf32>
    %10 = arith.subf %9, %5 : vector<128x128xf32>
    %c0_7 = arith.constant 0 : index
    %c0_8 = arith.constant 0 : index
    %11 = vector.load %arg6[%c0_7, %c0_8] : memref<128x1xi32, #tpu.memory_space<vmem>>, vector<128x1xi32>
    %c0_9 = arith.constant 0 : index
    %c0_10 = arith.constant 0 : index
    %12 = vector.load %arg7[%c0_9, %c0_10] : memref<1x128xi32, #tpu.memory_space<vmem>>, vector<1x128xi32>
    %13 = vector.broadcast %11 : vector<128x1xi32> to vector<128x128xi32>
    %14 = vector.broadcast %12 : vector<1x128xi32> to vector<128x128xi32>
    %15 = arith.cmpi eq, %13, %14 : vector<128x128xi32>
    %16 = tpu.iota {dimensions = array<i32: 1>} : vector<1x128xi32>
    %c128_i32 = arith.constant 128 : i32
    %17 = arith.muli %arg1, %c128_i32 : i32
    %18 = vector.broadcast %17 : i32 to vector<1x128xi32>
    %19 = arith.addi %16, %18 : vector<1x128xi32>
    %c8_i32 = arith.constant 8 : i32
    %20 = vector.broadcast %c8_i32 : i32 to vector<1x128xi32>
    %21 = arith.cmpi slt, %19, %20 : vector<1x128xi32>
    %22 = vector.broadcast %21 : vector<1x128xi1> to vector<128x128xi1>
    %23 = arith.andi %15, %22 : vector<128x128xi1>
    %cst_11 = arith.constant dense<true> : vector<128x128xi1>
    %24 = arith.xori %15, %cst_11 : vector<128x128xi1>
    %25 = vector.broadcast %21 : vector<1x128xi1> to vector<128x128xi1>
    %26 = arith.andi %24, %25 : vector<128x128xi1>
    %cst_12 = arith.constant 0xFF800000 : f32
    %27 = vector.broadcast %cst_12 : f32 to vector<128x128xf32>
    %28 = arith.select %23, %10, %27 : vector<128x128xi1>, vector<128x128xf32>
    %cst_13 = arith.constant 0x7F800000 : f32
    %29 = vector.broadcast %cst_13 : f32 to vector<128x128xf32>
    %30 = arith.select %26, %10, %29 : vector<128x128xi1>, vector<128x128xf32>
    %c0_14 = arith.constant 0 : index
    %c0_15 = arith.constant 0 : index
    %31 = vector.load %arg9[%c0_14, %c0_15] : memref<128x128xf32, #tpu.memory_space<vmem>>, vector<128x128xf32>
    %c0_16 = arith.constant 0 : index
    %c0_17 = arith.constant 0 : index
    %32 = vector.load %arg10[%c0_16, %c0_17] : memref<128x128xf32, #tpu.memory_space<vmem>>, vector<128x128xf32>
    %33 = arith.maximumf %31, %28 : vector<128x128xf32>
    %34 = arith.minimumf %32, %30 : vector<128x128xf32>
    %c0_18 = arith.constant 0 : index
    %c0_19 = arith.constant 0 : index
    %35 = vector.load %arg9[%c0_18, %c0_19] : memref<128x128xf32, #tpu.memory_space<vmem>>, vector<128x128xf32>
    tpu.vector_store %arg9[%c0_18, %c0_19], %33 {strides = array<i32>} : memref<128x128xf32, #tpu.memory_space<vmem>>, vector<128x128xf32>,
    %c0_20 = arith.constant 0 : index
    %c0_21 = arith.constant 0 : index
    %36 = vector.load %arg10[%c0_20, %c0_21] : memref<128x128xf32, #tpu.memory_space<vmem>>, vector<128x128xf32>
    tpu.vector_store %arg10[%c0_20, %c0_21], %34 {strides = array<i32>} : memref<128x128xf32, #tpu.memory_space<vmem>>, vector<128x128xf32>,
    %c0_i32_22 = arith.constant 0 : i32
    %37 = arith.cmpi eq, %arg1, %c0_i32_22 : i32
    %38 = arith.extui %37 : i1 to i32
    %c0_i32_23 = arith.constant 0 : i32
    %39 = arith.cmpi ne, %38, %c0_i32_23 : i32
    scf.if %39 {
      %c0_24 = arith.constant 0 : index
      %c0_25 = arith.constant 0 : index
      %40 = vector.load %arg4[%c0_24, %c0_25] : memref<128x1xf32, #tpu.memory_space<vmem>>, vector<128x1xf32>
      %c0_26 = arith.constant 0 : index
      %c0_27 = arith.constant 0 : index
      %41 = vector.load %arg9[%c0_26, %c0_27] : memref<128x128xf32, #tpu.memory_space<vmem>>, vector<128x128xf32>
      %cst_28 = arith.constant dense<0xFF800000> : vector<128xf32>
      %42 = vector.multi_reduction <maximumf>, %41, %cst_28 [1] : vector<128x128xf32> to vector<128xf32>
      %43 = vector.shape_cast %42 : vector<128xf32> to vector<128x1xf32>
      %c0_29 = arith.constant 0 : index
      %c0_30 = arith.constant 0 : index
      %44 = vector.load %arg10[%c0_29, %c0_30] : memref<128x128xf32, #tpu.memory_space<vmem>>, vector<128x128xf32>
      %cst_31 = arith.constant dense<0x7F800000> : vector<128xf32>
      %45 = vector.multi_reduction <minimumf>, %44, %cst_31 [1] : vector<128x128xf32> to vector<128xf32>
      %46 = vector.shape_cast %45 : vector<128xf32> to vector<128x1xf32>
      %cst_32 = arith.constant 2.000000e+00 : f32
      %47 = vector.broadcast %cst_32 : f32 to vector<128x1xf32>
      %48 = arith.mulf %47, %43 : vector<128x1xf32>
      %49 = arith.addf %40, %48 : vector<128x1xf32>
      %cst_33 = arith.constant 9.99999996E-13 : f32
      %50 = vector.broadcast %cst_33 : f32 to vector<128x1xf32>
      %51 = arith.maximumf %49, %50 : vector<128x1xf32>
      %52 = math.sqrt %51 : vector<128x1xf32>
      %cst_34 = arith.constant 2.000000e+00 : f32
      %53 = vector.broadcast %cst_34 : f32 to vector<128x1xf32>
      %54 = arith.mulf %53, %46 : vector<128x1xf32>
      %55 = arith.addf %40, %54 : vector<128x1xf32>
      %cst_35 = arith.constant 9.99999996E-13 : f32
      %56 = vector.broadcast %cst_35 : f32 to vector<128x1xf32>
      %57 = arith.maximumf %55, %56 : vector<128x1xf32>
      %58 = math.sqrt %57 : vector<128x1xf32>
      %59 = arith.subf %52, %58 : vector<128x1xf32>
      %cst_36 = arith.constant 3.000000e-01 : f32
      %60 = vector.broadcast %cst_36 : f32 to vector<128x1xf32>
      %61 = arith.addf %59, %60 : vector<128x1xf32>
      %cst_37 = arith.constant 0.000000e+00 : f32
      %62 = vector.broadcast %cst_37 : f32 to vector<128x1xf32>
      %63 = arith.maximumf %61, %62 : vector<128x1xf32>
      %64 = tpu.iota {dimensions = array<i32: 0>} : vector<128x1xi32>
      %c128_i32_38 = arith.constant 128 : i32
      %65 = arith.muli %arg0, %c128_i32_38 : i32
      %66 = vector.broadcast %65 : i32 to vector<128x1xi32>
      %67 = arith.addi %64, %66 : vector<128x1xi32>
      %c8_i32_39 = arith.constant 8 : i32
      %68 = vector.broadcast %c8_i32_39 : i32 to vector<128x1xi32>
      %69 = arith.cmpi slt, %67, %68 : vector<128x1xi32>
      %cst_40 = arith.constant 0.000000e+00 : f32
      %70 = vector.broadcast %cst_40 : f32 to vector<128x1xf32>
      %71 = arith.select %69, %63, %70 : vector<128x1xi1>, vector<128x1xf32>
      %72 = vector.shape_cast %71 : vector<128x1xf32> to vector<1x128x1xf32>
      %cst_41 = arith.constant dense<0.000000e+00> : vector<1xf32>
      %73 = vector.multi_reduction <add>, %72, %cst_41 [1, 2] : vector<1x128x1xf32> to vector<1xf32>
      %74 = vector.shape_cast %73 : vector<1xf32> to vector<1x1x1xf32>
      %75 = vector.extract %74[0, 0, 0] : f32 from vector<1x1x1xf32>
      %76 = vector.broadcast %75 : f32 to vector<1x8x128xf32>
      %c0_42 = arith.constant 0 : index
      %c0_43 = arith.constant 0 : index
      %c0_44 = arith.constant 0 : index
      %77 = vector.load %arg8[%c0_42, %c0_43, %c0_44] : memref<1x8x128xf32, #tpu.memory_space<vmem>>, vector<1x8x128xf32>
      tpu.vector_store %arg8[%c0_42, %c0_43, %c0_44], %76 {strides = array<i32>} : memref<1x8x128xf32, #tpu.memory_space<vmem>>, vector<1x8x128xf32>,
    } else {
    }
    return
  }
  func.func @transform_0(%arg0: i32, %arg1: i32) -> (i32, i32) {
    %c0_i32 = arith.constant 0 : i32
    %c0_i32_0 = arith.constant 0 : i32
    return %arg0, %c0_i32 : i32, i32
  }
  func.func @transform_1(%arg0: i32, %arg1: i32) -> (i32, i32) {
    %c0_i32 = arith.constant 0 : i32
    %c0_i32_0 = arith.constant 0 : i32
    return %arg1, %c0_i32 : i32, i32
  }
  func.func @transform_2(%arg0: i32, %arg1: i32) -> (i32, i32) {
    %c0_i32 = arith.constant 0 : i32
    %c0_i32_0 = arith.constant 0 : i32
    return %arg0, %c0_i32 : i32, i32
  }
  func.func @transform_3(%arg0: i32, %arg1: i32) -> (i32, i32) {
    %c0_i32 = arith.constant 0 : i32
    %c0_i32_0 = arith.constant 0 : i32
    return %c0_i32, %arg1 : i32, i32
  }
  func.func @transform_4(%arg0: i32, %arg1: i32) -> (i32, i32) {
    %c0_i32 = arith.constant 0 : i32
    %c0_i32_0 = arith.constant 0 : i32
    return %arg0, %c0_i32 : i32, i32
  }
  func.func @transform_5(%arg0: i32, %arg1: i32) -> (i32, i32) {
    %c0_i32 = arith.constant 0 : i32
    %c0_i32_0 = arith.constant 0 : i32
    return %c0_i32, %arg1 : i32, i32
  }
  func.func @transform_6(%arg0: i32, %arg1: i32) -> (i32, i32, i32) {
    %c0_i32 = arith.constant 0 : i32
    %c0_i32_0 = arith.constant 0 : i32
    %c0_i32_1 = arith.constant 0 : i32
    return %arg0, %c0_i32, %c0_i32_0 : i32, i32, i32
  }
}

</mosaic_0001>

<llo_original>
// kernel: tpu_custom_call.1
$region0: #{tpu_custom_call.1}
  #allocation0 [shape = 'u32[]', space=smem, size = 0x4, offset = 0x4, fixed_abs, tag = 'smem constant byte address 0x4 - core index']
  #allocation1 [shape = 'u32[144,128]{1,0:T(1,128)}', space=vmem, size = 0x12000, scoped, tag = 'internal scratch']
  #allocation2 [shape = 'f32[128,128]{1,0:T(8,128)}', space=vmem, size = 0x10000, scoped, tag = 'scratch operand']
  #allocation3 [shape = 'f32[128,128]{1,0:T(8,128)}', space=vmem, size = 0x10000, scoped, tag = 'scratch operand']
  %s0 = inlined_call_operand.vmem [shape: f32[128,128], index: 0, kind: input, shape index: {}]
  %s1 = inlined_call_operand.vmem [shape: f32[128,128], index: 1, kind: input, shape index: {}]
  %s2 = inlined_call_operand.vmem [shape: f32[128,1], index: 2, kind: input, shape index: {}]
  %s3 = inlined_call_operand.vmem [shape: f32[1,128], index: 3, kind: input, shape index: {}]
  %s4 = inlined_call_operand.vmem [shape: s32[128,1], index: 4, kind: input, shape index: {}]
  %s5 = inlined_call_operand.vmem [shape: s32[1,128], index: 5, kind: input, shape index: {}]
  %s6 = inlined_call_operand.hbm [shape: f32[1,8,128], index: 6, kind: output, shape index: {}]
  %s7 = sld [smem:[#allocation0]]
  $region42: #{tpu_custom_call.1} parent=0
    _
  %s9 = ssub.s32 1, %s7
  %s10 = scalar_select 0, %s9, %s7
  $region1: #{tpu_custom_call.1} parent=0
    #allocation4 [shape = 'u8[4096]{0}', space=vmem, size = 0x1000, scoped, tag = 'output window, operand 0, single buffered']
    #allocation5 [shape = 's32[1]{0}', space=sflag, size = 0x4, scoped, tag = 'scoped memory for tpu_custom_call.1']
    %11 = vsyncpa [#allocation5], 0
    // Predicated region
    $region2: #{tpu_custom_call.1} parent=1 // pred_check
      _
    $region3: #{tpu_custom_call.1} parent=1 // pred_check_branch
      %13 = sbr.rel (0) target = $region5
    $region4: #{tpu_custom_call.1} parent=1 // pred_region
      _
    $region5: #{tpu_custom_call.1} parent=1 // pred_fallthru
      _
    // Predicated region
    $region6: #{tpu_custom_call.1} parent=1 // pred_check
      _
    $region7: #{tpu_custom_call.1} parent=1 // pred_check_branch
      %15 = sbr.rel (0) target = $region9
    $region8: #{tpu_custom_call.1} parent=1 // pred_region
      _
    $region9: #{tpu_custom_call.1} parent=1 // pred_fallthru
      _
    // Predicated region
    $region10: #{tpu_custom_call.1} parent=1 // pred_check
      _
    $region11: #{tpu_custom_call.1} parent=1 // pred_check_branch
      %17 = sbr.rel (0) target = $region13
    $region12: #{tpu_custom_call.1} parent=1 // pred_region
      _
    $region13: #{tpu_custom_call.1} parent=1 // pred_fallthru
      _
    // Predicated region
    $region14: #{tpu_custom_call.1} parent=1 // pred_check
      _
    $region15: #{tpu_custom_call.1} parent=1 // pred_check_branch
      %19 = sbr.rel (0) target = $region17
    $region16: #{tpu_custom_call.1} parent=1 // pred_region
      _
    $region17: #{tpu_custom_call.1} parent=1 // pred_fallthru
      _
    // Predicated region
    $region18: #{tpu_custom_call.1} parent=1 // pred_check
      _
    $region19: #{tpu_custom_call.1} parent=1 // pred_check_branch
      %21 = sbr.rel (0) target = $region21
    $region20: #{tpu_custom_call.1} parent=1 // pred_region
      _
    $region21: #{tpu_custom_call.1} parent=1 // pred_fallthru
      _
    // Predicated region
    $region22: #{tpu_custom_call.1} parent=1 // pred_check
      _
    $region23: #{tpu_custom_call.1} parent=1 // pred_check_branch
      %23 = sbr.rel (0) target = $region25
    $region24: #{tpu_custom_call.1} parent=1 // pred_region
      _
    $region25: #{tpu_custom_call.1} parent=1 // pred_fallthru
      _
    %p24 = scmp.eq.s32.totalorder 0, 0
    // Predicated region
    $region26: #{tpu_custom_call.1} parent=1 // pred_check
      %p25 = pneg %p24
    $region27: #{tpu_custom_call.1} parent=1 // pred_check_branch
      %27 = sbr.rel (%p25) target = $region29
    $region28: #{tpu_custom_call.1} parent=1 // pred_region
      %28 = vst [vmem:[#allocation2] sm:$0xff] -inf
      %29 = vst [vmem:[#allocation2 + $0x8] sm:$0xff] -inf
      %30 = vst [vmem:[#allocation2 + $0x10] sm:$0xff] -inf
      %31 = vst [vmem:[#allocation2 + $0x18] sm:$0xff] -inf
      %32 = vst [vmem:[#allocation2 + $0x20] sm:$0xff] -inf
      %33 = vst [vmem:[#allocation2 + $0x28] sm:$0xff] -inf
      %34 = vst [vmem:[#allocation2 + $0x30] sm:$0xff] -inf
      %35 = vst [vmem:[#allocation2 + $0x38] sm:$0xff] -inf
      %36 = vst [vmem:[#allocation2 + $0x40] sm:$0xff] -inf
      %37 = vst [vmem:[#allocation2 + $0x48] sm:$0xff] -inf
      %38 = vst [vmem:[#allocation2 + $0x50] sm:$0xff] -inf
      %39 = vst [vmem:[#allocation2 + $0x58] sm:$0xff] -inf
      %40 = vst [vmem:[#allocation2 + $0x60] sm:$0xff] -inf
      %41 = vst [vmem:[#allocation2 + $0x68] sm:$0xff] -inf
      %42 = vst [vmem:[#allocation2 + $0x70] sm:$0xff] -inf
      %43 = vst [vmem:[#allocation2 + $0x78] sm:$0xff] -inf
      %44 = vst [vmem:[#allocation3] sm:$0xff] inf
      %45 = vst [vmem:[#allocation3 + $0x8] sm:$0xff] inf
      %46 = vst [vmem:[#allocation3 + $0x10] sm:$0xff] inf
      %47 = vst [vmem:[#allocation3 + $0x18] sm:$0xff] inf
      %48 = vst [vmem:[#allocation3 + $0x20] sm:$0xff] inf
      %49 = vst [vmem:[#allocation3 + $0x28] sm:$0xff] inf
      %50 = vst [vmem:[#allocation3 + $0x30] sm:$0xff] inf
      %51 = vst [vmem:[#allocation3 + $0x38] sm:$0xff] inf
      %52 = vst [vmem:[#allocation3 + $0x40] sm:$0xff] inf
      %53 = vst [vmem:[#allocation3 + $0x48] sm:$0xff] inf
      %54 = vst [vmem:[#allocation3 + $0x50] sm:$0xff] inf
      %55 = vst [vmem:[#allocation3 + $0x58] sm:$0xff] inf
      %56 = vst [vmem:[#allocation3 + $0x60] sm:$0xff] inf
      %57 = vst [vmem:[#allocation3 + $0x68] sm:$0xff] inf
      %58 = vst [vmem:[#allocation3 + $0x70] sm:$0xff] inf
      %59 = vst [vmem:[#allocation3 + $0x78] sm:$0xff] inf
    $region29: #{tpu_custom_call.1} parent=1 // pred_fallthru
      _
    %v60 = vld [vmem:[%s0] sm:$0xff]
    %v61 = vld [vmem:[%s0 + $0x8] sm:$0xff]
    %v62 = vld [vmem:[%s0 + $0x10] sm:$0xff]
    %v63 = vld [vmem:[%s0 + $0x18] sm:$0xff]
    %v64 = vld [vmem:[%s0 + $0x20] sm:$0xff]
    %v65 = vld [vmem:[%s0 + $0x28] sm:$0xff]
    %v66 = vld [vmem:[%s0 + $0x30] sm:$0xff]
    %v67 = vld [vmem:[%s0 + $0x38] sm:$0xff]
    %v68 = vld [vmem:[%s0 + $0x40] sm:$0xff]
    %v69 = vld [vmem:[%s0 + $0x48] sm:$0xff]
    %v70 = vld [vmem:[%s0 + $0x50] sm:$0xff]
    %v71 = vld [vmem:[%s0 + $0x58] sm:$0xff]
    %v72 = vld [vmem:[%s0 + $0x60] sm:$0xff]
    %v73 = vld [vmem:[%s0 + $0x68] sm:$0xff]
    %v74 = vld [vmem:[%s0 + $0x70] sm:$0xff]
    %v75 = vld [vmem:[%s0 + $0x78] sm:$0xff]
    %v76 = vld [vmem:[%s1] sm:$0xff]
    %v77 = vld [vmem:[%s1 + $0x8] sm:$0xff]
    %v78 = vld [vmem:[%s1 + $0x10] sm:$0xff]
    %v79 = vld [vmem:[%s1 + $0x18] sm:$0xff]
    %v80 = vld [vmem:[%s1 + $0x20] sm:$0xff]
    %v81 = vld [vmem:[%s1 + $0x28] sm:$0xff]
    %v82 = vld [vmem:[%s1 + $0x30] sm:$0xff]
    %v83 = vld [vmem:[%s1 + $0x38] sm:$0xff]
    %v84 = vld [vmem:[%s1 + $0x40] sm:$0xff]
    %v85 = vld [vmem:[%s1 + $0x48] sm:$0xff]
    %v86 = vld [vmem:[%s1 + $0x50] sm:$0xff]
    %v87 = vld [vmem:[%s1 + $0x58] sm:$0xff]
    %v88 = vld [vmem:[%s1 + $0x60] sm:$0xff]
    %v89 = vld [vmem:[%s1 + $0x68] sm:$0xff]
    %v90 = vld [vmem:[%s1 + $0x70] sm:$0xff]
    %v91 = vld [vmem:[%s1 + $0x78] sm:$0xff]
    %92 = vmatprep.subr.mxu0 0.0
    %93 = vmatpush1.xpose.msra.mxu0 %v91
    %94 = vmatprep.subr.mxu0 0.0
    %95 = vmatpush1.xpose.msra.mxu0 %v90
    %96 = vmatprep.subr.mxu0 0.0
    %97 = vmatpush1.xpose.msra.mxu0 %v89
    %98 = vmatprep.subr.mxu0 0.0
    %99 = vmatpush1.xpose.msra.mxu0 %v88
    %100 = vmatprep.subr.mxu0 0.0
    %101 = vmatpush1.xpose.msra.mxu0 %v87
    %102 = vmatprep.subr.mxu0 0.0
    %103 = vmatpush1.xpose.msra.mxu0 %v86
    %104 = vmatprep.subr.mxu0 0.0
    %105 = vmatpush1.xpose.msra.mxu0 %v85
    %106 = vmatprep.subr.mxu0 0.0
    %107 = vmatpush1.xpose.msra.mxu0 %v84
    %108 = vmatprep.subr.mxu0 0.0
    %109 = vmatpush1.xpose.msra.mxu0 %v83
    %110 = vmatprep.subr.mxu0 0.0
    %111 = vmatpush1.xpose.msra.mxu0 %v82
    %112 = vmatprep.subr.mxu0 0.0
    %113 = vmatpush1.xpose.msra.mxu0 %v81
    %114 = vmatprep.subr.mxu0 0.0
    %115 = vmatpush1.xpose.msra.mxu0 %v80
    %116 = vmatprep.subr.mxu0 0.0
    %117 = vmatpush1.xpose.msra.mxu0 %v79
    %118 = vmatprep.subr.mxu0 0.0
    %119 = vmatpush1.xpose.msra.mxu0 %v78
    %120 = vmatprep.subr.mxu0 0.0
    %121 = vmatpush1.xpose.msra.mxu0 %v77
    %122 = vmatprep.subr.mxu0 0.0
    %123 = vmatpush1.xpose.msra.mxu0 %v76
    %124 = vmatprep.subr.mxu0 0.0
    %125 = vmatpush2.xpose.msra.mxu0 0.0
    %126 = vmatprep.subr.mxu0 0.0
    %127 = vmatpush2.xpose.msra.mxu0 0.0
    %128 = vmatprep.subr.mxu0 0.0
    %129 = vmatpush2.xpose.msra.mxu0 0.0
    %130 = vmatprep.subr.mxu0 0.0
    %131 = vmatpush2.xpose.msra.mxu0 0.0
    %132 = vmatprep.subr.mxu0 0.0
    %133 = vmatpush2.xpose.msra.mxu0 0.0
    %134 = vmatprep.subr.mxu0 0.0
    %135 = vmatpush2.xpose.msra.mxu0 0.0
    %136 = vmatprep.subr.mxu0 0.0
    %137 = vmatpush2.xpose.msra.mxu0 0.0
    %138 = vmatprep.subr.mxu0 0.0
    %139 = vmatpush2.xpose.msra.mxu0 0.0
    %140 = vmatprep.subr.mxu0 0.0
    %141 = vmatpush2.xpose.msra.mxu0 0.0
    %142 = vmatprep.subr.mxu0 0.0
    %143 = vmatpush2.xpose.msra.mxu0 0.0
    %144 = vmatprep.subr.mxu0 0.0
    %145 = vmatpush2.xpose.msra.mxu0 0.0
    %146 = vmatprep.subr.mxu0 0.0
    %147 = vmatpush2.xpose.msra.mxu0 0.0
    %148 = vmatprep.subr.mxu0 0.0
    %149 = vmatpush2.xpose.msra.mxu0 0.0
    %150 = vmatprep.subr.mxu0 0.0
    %151 = vmatpush2.xpose.msra.mxu0 0.0
    %152 = vmatprep.subr.mxu0 0.0
    %153 = vmatpush2.xpose.msra.mxu0 0.0
    %154 = vmatprep.subr.mxu0 0.0
    %155 = vmatpush2.xpose.msra.mxu0 0.0
    %156 = vmatprep.mubr.f32.mxu0 0.0
    %157 = vmatmul.mubr.f32.gmra.mxu0 %v60
    %v158 = vpop.f32.mrf.mxu0
    %v159 = vadd.f32 0.0, %v158
    %v160 = vpop.f32.mrf.mxu0
    %161 = vmatprep.mubr.f32.mxu0 0.0
    %162 = vmatmul.mubr.f32.gmra.mxu0 %v61
    %v163 = vpop.f32.mrf.mxu0
    %v164 = vadd.f32 0.0, %v163
    %v165 = vpop.f32.mrf.mxu0
    %166 = vmatprep.mubr.f32.mxu0 0.0
    %167 = vmatmul.mubr.f32.gmra.mxu0 %v62
    %v168 = vpop.f32.mrf.mxu0
    %v169 = vadd.f32 0.0, %v168
    %v170 = vpop.f32.mrf.mxu0
    %171 = vmatprep.mubr.f32.mxu0 0.0
    %172 = vmatmul.mubr.f32.gmra.mxu0 %v63
    %v173 = vpop.f32.mrf.mxu0
    %v174 = vadd.f32 0.0, %v173
    %v175 = vpop.f32.mrf.mxu0
    %176 = vmatprep.mubr.f32.mxu0 0.0
    %177 = vmatmul.mubr.f32.gmra.mxu0 %v64
    %v178 = vpop.f32.mrf.mxu0
    %v179 = vadd.f32 0.0, %v178
    %v180 = vpop.f32.mrf.mxu0
    %181 = vmatprep.mubr.f32.mxu0 0.0
    %182 = vmatmul.mubr.f32.gmra.mxu0 %v65
    %v183 = vpop.f32.mrf.mxu0
    %v184 = vadd.f32 0.0, %v183
    %v185 = vpop.f32.mrf.mxu0
    %186 = vmatprep.mubr.f32.mxu0 0.0
    %187 = vmatmul.mubr.f32.gmra.mxu0 %v66
    %v188 = vpop.f32.mrf.mxu0
    %v189 = vadd.f32 0.0, %v188
    %v190 = vpop.f32.mrf.mxu0
    %191 = vmatprep.mubr.f32.mxu0 0.0
    %192 = vmatmul.mubr.f32.gmra.mxu0 %v67
    %v193 = vpop.f32.mrf.mxu0
    %v194 = vadd.f32 0.0, %v193
    %v195 = vpop.f32.mrf.mxu0
    %196 = vmatprep.mubr.f32.mxu0 0.0
    %197 = vmatmul.mubr.f32.gmra.mxu0 %v68
    %v198 = vpop.f32.mrf.mxu0
    %v199 = vadd.f32 0.0, %v198
    %v200 = vpop.f32.mrf.mxu0
    %201 = vmatprep.mubr.f32.mxu0 0.0
    %202 = vmatmul.mubr.f32.gmra.mxu0 %v69
    %v203 = vpop.f32.mrf.mxu0
    %v204 = vadd.f32 0.0, %v203
    %v205 = vpop.f32.mrf.mxu0
    %206 = vmatprep.mubr.f32.mxu0 0.0
    %207 = vmatmul.mubr.f32.gmra.mxu0 %v70
    %v208 = vpop.f32.mrf.mxu0
    %v209 = vadd.f32 0.0, %v208
    %v210 = vpop.f32.mrf.mxu0
    %211 = vmatprep.mubr.f32.mxu0 0.0
    %212 = vmatmul.mubr.f32.gmra.mxu0 %v71
    %v213 = vpop.f32.mrf.mxu0
    %v214 = vadd.f32 0.0, %v213
    %v215 = vpop.f32.mrf.mxu0
    %216 = vmatprep.mubr.f32.mxu0 0.0
    %217 = vmatmul.mubr.f32.gmra.mxu0 %v72
    %v218 = vpop.f32.mrf.mxu0
    %v219 = vadd.f32 0.0, %v218
    %v220 = vpop.f32.mrf.mxu0
    %221 = vmatprep.mubr.f32.mxu0 0.0
    %222 = vmatmul.mubr.f32.gmra.mxu0 %v73
    %v223 = vpop.f32.mrf.mxu0
    %v224 = vadd.f32 0.0, %v223
    %v225 = vpop.f32.mrf.mxu0
    %226 = vmatprep.mubr.f32.mxu0 0.0
    %227 = vmatmul.mubr.f32.gmra.mxu0 %v74
    %v228 = vpop.f32.mrf.mxu0
    %v229 = vadd.f32 0.0, %v228
    %v230 = vpop.f32.mrf.mxu0
    %231 = vmatprep.mubr.f32.mxu0 0.0
    %232 = vmatmul.mubr.f32.gmra.mxu0 %v75
    %v233 = vpop.f32.mrf.mxu0
    %v234 = vadd.f32 0.0, %v233
    %v235 = vpop.f32.mrf.mxu0
    %236 = vdwg.mxu0
    %v237 = vld [vmem:[%s3] sm:$0x1]
    %v238 = vmul.f32 %v237, 0.5
    %v240 = vlaneseq
    %v241 = vshrl.u32 %v240, 7
    %v242 = vsub.s32 0, %v241
    %v243 = vrot.slane %v238, %v242
    %v245 = vsub.f32 %v243, %v159
    %v246 = vsub.f32 %v243, %v164
    %v247 = vsub.f32 %v243, %v169
    %v248 = vsub.f32 %v243, %v174
    %v249 = vsub.f32 %v243, %v179
    %v250 = vsub.f32 %v243, %v184
    %v251 = vsub.f32 %v243, %v189
    %v252 = vsub.f32 %v243, %v194
    %v253 = vsub.f32 %v243, %v199
    %v254 = vsub.f32 %v243, %v204
    %v255 = vsub.f32 %v243, %v209
    %v256 = vsub.f32 %v243, %v214
    %v257 = vsub.f32 %v243, %v219
    %v258 = vsub.f32 %v243, %v224
    %v259 = vsub.f32 %v243, %v229
    %v260 = vsub.f32 %v243, %v234
    %v261 = vld [vmem:[%s4] sm:$0xff]
    %v262 = vld [vmem:[%s4 + $0x8] sm:$0xff]
    %v263 = vld [vmem:[%s4 + $0x10] sm:$0xff]
    %v264 = vld [vmem:[%s4 + $0x18] sm:$0xff]
    %v265 = vld [vmem:[%s4 + $0x20] sm:$0xff]
    %v266 = vld [vmem:[%s4 + $0x28] sm:$0xff]
    %v267 = vld [vmem:[%s4 + $0x30] sm:$0xff]
    %v268 = vld [vmem:[%s4 + $0x38] sm:$0xff]
    %v269 = vld [vmem:[%s4 + $0x40] sm:$0xff]
    %v270 = vld [vmem:[%s4 + $0x48] sm:$0xff]
    %v271 = vld [vmem:[%s4 + $0x50] sm:$0xff]
    %v272 = vld [vmem:[%s4 + $0x58] sm:$0xff]
    %v273 = vld [vmem:[%s4 + $0x60] sm:$0xff]
    %v274 = vld [vmem:[%s4 + $0x68] sm:$0xff]
    %v275 = vld [vmem:[%s4 + $0x70] sm:$0xff]
    %v276 = vld [vmem:[%s4 + $0x78] sm:$0xff]
    %v277 = vld [vmem:[%s5] sm:$0x1]
    %278 = vset.pattern.permute.xlu0 0
    %279 = vperm.xlu0 %278, %v261
    %v280 = vpop.permute.xlu0 %279
    %281 = vset.pattern.permute.xlu0 0
    %282 = vperm.xlu0 %281, %v262
    %v283 = vpop.permute.xlu0 %282
    %284 = vset.pattern.permute.xlu0 0
    %285 = vperm.xlu0 %284, %v263
    %v286 = vpop.permute.xlu0 %285
    %287 = vset.pattern.permute.xlu0 0
    %288 = vperm.xlu0 %287, %v264
    %v289 = vpop.permute.xlu0 %288
    %290 = vset.pattern.permute.xlu0 0
    %291 = vperm.xlu0 %290, %v265
    %v292 = vpop.permute.xlu0 %291
    %293 = vset.pattern.permute.xlu0 0
    %294 = vperm.xlu0 %293, %v266
    %v295 = vpop.permute.xlu0 %294
    %296 = vset.pattern.permute.xlu0 0
    %297 = vperm.xlu0 %296, %v267
    %v298 = vpop.permute.xlu0 %297
    %299 = vset.pattern.permute.xlu0 0
    %300 = vperm.xlu0 %299, %v268
    %v301 = vpop.permute.xlu0 %300
    %302 = vset.pattern.permute.xlu0 0
    %303 = vperm.xlu0 %302, %v269
    %v304 = vpop.permute.xlu0 %303
    %305 = vset.pattern.permute.xlu0 0
    %306 = vperm.xlu0 %305, %v270
    %v307 = vpop.permute.xlu0 %306
    %308 = vset.pattern.permute.xlu0 0
    %309 = vperm.xlu0 %308, %v271
    %v310 = vpop.permute.xlu0 %309
    %311 = vset.pattern.permute.xlu0 0
    %312 = vperm.xlu0 %311, %v272
    %v313 = vpop.permute.xlu0 %312
    %314 = vset.pattern.permute.xlu0 0
    %315 = vperm.xlu0 %314, %v273
    %v316 = vpop.permute.xlu0 %315
    %317 = vset.pattern.permute.xlu0 0
    %318 = vperm.xlu0 %317, %v274
    %v319 = vpop.permute.xlu0 %318
    %320 = vset.pattern.permute.xlu0 0
    %321 = vperm.xlu0 %320, %v275
    %v322 = vpop.permute.xlu0 %321
    %323 = vset.pattern.permute.xlu0 0
    %324 = vperm.xlu0 %323, %v276
    %v325 = vpop.permute.xlu0 %324
    %v326 = vlaneseq
    %v327 = vshrl.u32 %v326, 7
    %v328 = vsub.s32 0, %v327
    %v329 = vrot.slane %v277, %v328
    %vm330 = vcmp.eq.s32.totalorder %v280, %v329
    %vm331 = vcmp.eq.s32.totalorder %v283, %v329
    %vm332 = vcmp.eq.s32.totalorder %v286, %v329
    %vm333 = vcmp.eq.s32.totalorder %v289, %v329
    %vm334 = vcmp.eq.s32.totalorder %v292, %v329
    %vm335 = vcmp.eq.s32.totalorder %v295, %v329
    %vm336 = vcmp.eq.s32.totalorder %v298, %v329
    %vm337 = vcmp.eq.s32.totalorder %v301, %v329
    %vm338 = vcmp.eq.s32.totalorder %v304, %v329
    %vm339 = vcmp.eq.s32.totalorder %v307, %v329
    %vm340 = vcmp.eq.s32.totalorder %v310, %v329
    %vm341 = vcmp.eq.s32.totalorder %v313, %v329
    %vm342 = vcmp.eq.s32.totalorder %v316, %v329
    %vm343 = vcmp.eq.s32.totalorder %v319, %v329
    %vm344 = vcmp.eq.s32.totalorder %v322, %v329
    %vm345 = vcmp.eq.s32.totalorder %v325, %v329
    %v346 = vlaneseq
    %v347 = vand.u32 %v346, 127
    %s348 = smul.u32 0, 128
    %v349 = vstv %s348
    %v350 = vadd.s32 %v347, %v349
    %vm351 = vcmp.lt.s32.totalorder %v350, 8
    %v352 = vsel %vm351, 1, 0
    %vm353 = vcmp.eq.s32.totalorder %v352, 1
    %vm354 = vmand %vm330, %vm353
    %vm355 = vmand %vm331, %vm353
    %vm356 = vmand %vm332, %vm353
    %vm357 = vmand %vm333, %vm353
    %vm358 = vmand %vm334, %vm353
    %vm359 = vmand %vm335, %vm353
    %vm360 = vmand %vm336, %vm353
    %vm361 = vmand %vm337, %vm353
    %vm362 = vmand %vm338, %vm353
    %vm363 = vmand %vm339, %vm353
    %vm364 = vmand %vm340, %vm353
    %vm365 = vmand %vm341, %vm353
    %vm366 = vmand %vm342, %vm353
    %vm367 = vmand %vm343, %vm353
    %vm368 = vmand %vm344, %vm353
    %vm369 = vmand %vm345, %vm353
    %vm370 = vmxor %vm330, 1
    %vm371 = vmxor %vm331, 1
    %vm372 = vmxor %vm332, 1
    %vm373 = vmxor %vm333, 1
    %vm374 = vmxor %vm334, 1
    %vm375 = vmxor %vm335, 1
    %vm376 = vmxor %vm336, 1
    %vm377 = vmxor %vm337, 1
    %vm378 = vmxor %vm338, 1
    %vm379 = vmxor %vm339, 1
    %vm380 = vmxor %vm340, 1
    %vm381 = vmxor %vm341, 1
    %vm382 = vmxor %vm342, 1
    %vm383 = vmxor %vm343, 1
    %vm384 = vmxor %vm344, 1
    %vm385 = vmxor %vm345, 1
    %vm386 = vmand %vm370, %vm353
    %vm387 = vmand %vm371, %vm353
    %vm388 = vmand %vm372, %vm353
    %vm389 = vmand %vm373, %vm353
    %vm390 = vmand %vm374, %vm353
    %vm391 = vmand %vm375, %vm353
    %vm392 = vmand %vm376, %vm353
    %vm393 = vmand %vm377, %vm353
    %vm394 = vmand %vm378, %vm353
    %vm395 = vmand %vm379, %vm353
    %vm396 = vmand %vm380, %vm353
    %vm397 = vmand %vm381, %vm353
    %vm398 = vmand %vm382, %vm353
    %vm399 = vmand %vm383, %vm353
    %vm400 = vmand %vm384, %vm353
    %vm401 = vmand %vm385, %vm353
    %v402 = vsel %vm354, %v245, -inf
    %v403 = vsel %vm355, %v246, -inf
    %v404 = vsel %vm356, %v247, -inf
    %v405 = vsel %vm357, %v248, -inf
    %v406 = vsel %vm358, %v249, -inf
    %v407 = vsel %vm359, %v250, -inf
    %v408 = vsel %vm360, %v251, -inf
    %v409 = vsel %vm361, %v252, -inf
    %v410 = vsel %vm362, %v253, -inf
    %v411 = vsel %vm363, %v254, -inf
    %v412 = vsel %vm364, %v255, -inf
    %v413 = vsel %vm365, %v256, -inf
    %v414 = vsel %vm366, %v257, -inf
    %v415 = vsel %vm367, %v258, -inf
    %v416 = vsel %vm368, %v259, -inf
    %v417 = vsel %vm369, %v260, -inf
    %v418 = vsel %vm386, %v245, inf
    %v419 = vsel %vm387, %v246, inf
    %v420 = vsel %vm388, %v247, inf
    %v421 = vsel %vm389, %v248, inf
    %v422 = vsel %vm390, %v249, inf
    %v423 = vsel %vm391, %v250, inf
    %v424 = vsel %vm392, %v251, inf
    %v425 = vsel %vm393, %v252, inf
    %v426 = vsel %vm394, %v253, inf
    %v427 = vsel %vm395, %v254, inf
    %v428 = vsel %vm396, %v255, inf
    %v429 = vsel %vm397, %v256, inf
    %v430 = vsel %vm398, %v257, inf
    %v431 = vsel %vm399, %v258, inf
    %v432 = vsel %vm400, %v259, inf
    %v433 = vsel %vm401, %v260, inf
    %v434 = vld [vmem:[#allocation2] sm:$0xff]
    %v435 = vld [vmem:[#allocation2 + $0x8] sm:$0xff]
    %v436 = vld [vmem:[#allocation2 + $0x10] sm:$0xff]
    %v437 = vld [vmem:[#allocation2 + $0x18] sm:$0xff]
    %v438 = vld [vmem:[#allocation2 + $0x20] sm:$0xff]
    %v439 = vld [vmem:[#allocation2 + $0x28] sm:$0xff]
    %v440 = vld [vmem:[#allocation2 + $0x30] sm:$0xff]
    %v441 = vld [vmem:[#allocation2 + $0x38] sm:$0xff]
    %v442 = vld [vmem:[#allocation2 + $0x40] sm:$0xff]
    %v443 = vld [vmem:[#allocation2 + $0x48] sm:$0xff]
    %v444 = vld [vmem:[#allocation2 + $0x50] sm:$0xff]
    %v445 = vld [vmem:[#allocation2 + $0x58] sm:$0xff]
    %v446 = vld [vmem:[#allocation2 + $0x60] sm:$0xff]
    %v447 = vld [vmem:[#allocation2 + $0x68] sm:$0xff]
    %v448 = vld [vmem:[#allocation2 + $0x70] sm:$0xff]
    %v449 = vld [vmem:[#allocation2 + $0x78] sm:$0xff]
    %v450 = vld [vmem:[#allocation3] sm:$0xff]
    %v451 = vld [vmem:[#allocation3 + $0x8] sm:$0xff]
    %v452 = vld [vmem:[#allocation3 + $0x10] sm:$0xff]
    %v453 = vld [vmem:[#allocation3 + $0x18] sm:$0xff]
    %v454 = vld [vmem:[#allocation3 + $0x20] sm:$0xff]
    %v455 = vld [vmem:[#allocation3 + $0x28] sm:$0xff]
    %v456 = vld [vmem:[#allocation3 + $0x30] sm:$0xff]
    %v457 = vld [vmem:[#allocation3 + $0x38] sm:$0xff]
    %v458 = vld [vmem:[#allocation3 + $0x40] sm:$0xff]
    %v459 = vld [vmem:[#allocation3 + $0x48] sm:$0xff]
    %v460 = vld [vmem:[#allocation3 + $0x50] sm:$0xff]
    %v461 = vld [vmem:[#allocation3 + $0x58] sm:$0xff]
    %v462 = vld [vmem:[#allocation3 + $0x60] sm:$0xff]
    %v463 = vld [vmem:[#allocation3 + $0x68] sm:$0xff]
    %v464 = vld [vmem:[#allocation3 + $0x70] sm:$0xff]
    %v465 = vld [vmem:[#allocation3 + $0x78] sm:$0xff]
    %v466 = vmax.f32 %v434, %v402
    %v467 = vmax.f32 %v435, %v403
    %v468 = vmax.f32 %v436, %v404
    %v469 = vmax.f32 %v437, %v405
    %v470 = vmax.f32 %v438, %v406
    %v471 = vmax.f32 %v439, %v407
    %v472 = vmax.f32 %v440, %v408
    %v473 = vmax.f32 %v441, %v409
    %v474 = vmax.f32 %v442, %v410
    %v475 = vmax.f32 %v443, %v411
    %v476 = vmax.f32 %v444, %v412
    %v477 = vmax.f32 %v445, %v413
    %v478 = vmax.f32 %v446, %v414
    %v479 = vmax.f32 %v447, %v415
    %v480 = vmax.f32 %v448, %v416
    %v481 = vmax.f32 %v449, %v417
    %v482 = vmin.f32 %v450, %v418
    %v483 = vmin.f32 %v451, %v419
    %v484 = vmin.f32 %v452, %v420
    %v485 = vmin.f32 %v453, %v421
    %v486 = vmin.f32 %v454, %v422
    %v487 = vmin.f32 %v455, %v423
    %v488 = vmin.f32 %v456, %v424
    %v489 = vmin.f32 %v457, %v425
    %v490 = vmin.f32 %v458, %v426
    %v491 = vmin.f32 %v459, %v427
    %v492 = vmin.f32 %v460, %v428
    %v493 = vmin.f32 %v461, %v429
    %v494 = vmin.f32 %v462, %v430
    %v495 = vmin.f32 %v463, %v431
    %v496 = vmin.f32 %v464, %v432
    %v497 = vmin.f32 %v465, %v433
    %498 = vst [vmem:[#allocation2] sm:$0xff] %v466
    %499 = vst [vmem:[#allocation2 + $0x8] sm:$0xff] %v467
    %500 = vst [vmem:[#allocation2 + $0x10] sm:$0xff] %v468
    %501 = vst [vmem:[#allocation2 + $0x18] sm:$0xff] %v469
    %502 = vst [vmem:[#allocation2 + $0x20] sm:$0xff] %v470
    %503 = vst [vmem:[#allocation2 + $0x28] sm:$0xff] %v471
    %504 = vst [vmem:[#allocation2 + $0x30] sm:$0xff] %v472
    %505 = vst [vmem:[#allocation2 + $0x38] sm:$0xff] %v473
    %506 = vst [vmem:[#allocation2 + $0x40] sm:$0xff] %v474
    %507 = vst [vmem:[#allocation2 + $0x48] sm:$0xff] %v475
    %508 = vst [vmem:[#allocation2 + $0x50] sm:$0xff] %v476
    %509 = vst [vmem:[#allocation2 + $0x58] sm:$0xff] %v477
    %510 = vst [vmem:[#allocation2 + $0x60] sm:$0xff] %v478
    %511 = vst [vmem:[#allocation2 + $0x68] sm:$0xff] %v479
    %512 = vst [vmem:[#allocation2 + $0x70] sm:$0xff] %v480
    %513 = vst [vmem:[#allocation2 + $0x78] sm:$0xff] %v481
    %514 = vst [vmem:[#allocation3] sm:$0xff] %v482
    %515 = vst [vmem:[#allocation3 + $0x8] sm:$0xff] %v483
    %516 = vst [vmem:[#allocation3 + $0x10] sm:$0xff] %v484
    %517 = vst [vmem:[#allocation3 + $0x18] sm:$0xff] %v485
    %518 = vst [vmem:[#allocation3 + $0x20] sm:$0xff] %v486
    %519 = vst [vmem:[#allocation3 + $0x28] sm:$0xff] %v487
    %520 = vst [vmem:[#allocation3 + $0x30] sm:$0xff] %v488
    %521 = vst [vmem:[#allocation3 + $0x38] sm:$0xff] %v489
    %522 = vst [vmem:[#allocation3 + $0x40] sm:$0xff] %v490
    %523 = vst [vmem:[#allocation3 + $0x48] sm:$0xff] %v491
    %524 = vst [vmem:[#allocation3 + $0x50] sm:$0xff] %v492
    %525 = vst [vmem:[#allocation3 + $0x58] sm:$0xff] %v493
    %526 = vst [vmem:[#allocation3 + $0x60] sm:$0xff] %v494
    %527 = vst [vmem:[#allocation3 + $0x68] sm:$0xff] %v495
    %528 = vst [vmem:[#allocation3 + $0x70] sm:$0xff] %v496
    %529 = vst [vmem:[#allocation3 + $0x78] sm:$0xff] %v497
    // Predicated region
    $region30: #{tpu_custom_call.1} parent=1 // pred_check
      %p530 = pneg %p24
    $region31: #{tpu_custom_call.1} parent=1 // pred_check_branch
      %532 = sbr.rel (%p530) target = $region33
    $region32: #{tpu_custom_call.1} parent=1 // pred_region
      %v533 = vld [vmem:[%s2] sm:$0xff]
      %v534 = vld [vmem:[%s2 + $0x8] sm:$0xff]
      %v535 = vld [vmem:[%s2 + $0x10] sm:$0xff]
      %v536 = vld [vmem:[%s2 + $0x18] sm:$0xff]
      %v537 = vld [vmem:[%s2 + $0x20] sm:$0xff]
      %v538 = vld [vmem:[%s2 + $0x28] sm:$0xff]
      %v539 = vld [vmem:[%s2 + $0x30] sm:$0xff]
      %v540 = vld [vmem:[%s2 + $0x38] sm:$0xff]
      %v541 = vld [vmem:[%s2 + $0x40] sm:$0xff]
      %v542 = vld [vmem:[%s2 + $0x48] sm:$0xff]
      %v543 = vld [vmem:[%s2 + $0x50] sm:$0xff]
      %v544 = vld [vmem:[%s2 + $0x58] sm:$0xff]
      %v545 = vld [vmem:[%s2 + $0x60] sm:$0xff]
      %v546 = vld [vmem:[%s2 + $0x68] sm:$0xff]
      %v547 = vld [vmem:[%s2 + $0x70] sm:$0xff]
      %v548 = vld [vmem:[%s2 + $0x78] sm:$0xff]
      %v549 = vld [vmem:[#allocation2] sm:$0xff]
      %v550 = vld [vmem:[#allocation2 + $0x8] sm:$0xff]
      %v551 = vld [vmem:[#allocation2 + $0x10] sm:$0xff]
      %v552 = vld [vmem:[#allocation2 + $0x18] sm:$0xff]
      %v553 = vld [vmem:[#allocation2 + $0x20] sm:$0xff]
      %v554 = vld [vmem:[#allocation2 + $0x28] sm:$0xff]
      %v555 = vld [vmem:[#allocation2 + $0x30] sm:$0xff]
      %v556 = vld [vmem:[#allocation2 + $0x38] sm:$0xff]
      %v557 = vld [vmem:[#allocation2 + $0x40] sm:$0xff]
      %v558 = vld [vmem:[#allocation2 + $0x48] sm:$0xff]
      %v559 = vld [vmem:[#allocation2 + $0x50] sm:$0xff]
      %v560 = vld [vmem:[#allocation2 + $0x58] sm:$0xff]
      %v561 = vld [vmem:[#allocation2 + $0x60] sm:$0xff]
      %v562 = vld [vmem:[#allocation2 + $0x68] sm:$0xff]
      %v563 = vld [vmem:[#allocation2 + $0x70] sm:$0xff]
      %v564 = vld [vmem:[#allocation2 + $0x78] sm:$0xff]
      %565 = vmax.xlane.f32.xlu0 %v549
      %v566 = vpop.xlane.xlu0 %565
      %567 = vmax.xlane.f32.xlu0 %v550
      %v568 = vpop.xlane.xlu0 %567
      %569 = vmax.xlane.f32.xlu0 %v551
      %v570 = vpop.xlane.xlu0 %569
      %571 = vmax.xlane.f32.xlu0 %v552
      %v572 = vpop.xlane.xlu0 %571
      %573 = vmax.xlane.f32.xlu0 %v553
      %v574 = vpop.xlane.xlu0 %573
      %575 = vmax.xlane.f32.xlu0 %v554
      %v576 = vpop.xlane.xlu0 %575
      %577 = vmax.xlane.f32.xlu0 %v555
      %v578 = vpop.xlane.xlu0 %577
      %579 = vmax.xlane.f32.xlu0 %v556
      %v580 = vpop.xlane.xlu0 %579
      %581 = vmax.xlane.f32.xlu0 %v557
      %v582 = vpop.xlane.xlu0 %581
      %583 = vmax.xlane.f32.xlu0 %v558
      %v584 = vpop.xlane.xlu0 %583
      %585 = vmax.xlane.f32.xlu0 %v559
      %v586 = vpop.xlane.xlu0 %585
      %587 = vmax.xlane.f32.xlu0 %v560
      %v588 = vpop.xlane.xlu0 %587
      %589 = vmax.xlane.f32.xlu0 %v561
      %v590 = vpop.xlane.xlu0 %589
      %591 = vmax.xlane.f32.xlu0 %v562
      %v592 = vpop.xlane.xlu0 %591
      %593 = vmax.xlane.f32.xlu0 %v563
      %v594 = vpop.xlane.xlu0 %593
      %595 = vmax.xlane.f32.xlu0 %v564
      %v596 = vpop.xlane.xlu0 %595
      %v597 = vld [vmem:[#allocation3] sm:$0xff]
      %v598 = vld [vmem:[#allocation3 + $0x8] sm:$0xff]
      %v599 = vld [vmem:[#allocation3 + $0x10] sm:$0xff]
      %v600 = vld [vmem:[#allocation3 + $0x18] sm:$0xff]
      %v601 = vld [vmem:[#allocation3 + $0x20] sm:$0xff]
      %v602 = vld [vmem:[#allocation3 + $0x28] sm:$0xff]
      %v603 = vld [vmem:[#allocation3 + $0x30] sm:$0xff]
      %v604 = vld [vmem:[#allocation3 + $0x38] sm:$0xff]
      %v605 = vld [vmem:[#allocation3 + $0x40] sm:$0xff]
      %v606 = vld [vmem:[#allocation3 + $0x48] sm:$0xff]
      %v607 = vld [vmem:[#allocation3 + $0x50] sm:$0xff]
      %v608 = vld [vmem:[#allocation3 + $0x58] sm:$0xff]
      %v609 = vld [vmem:[#allocation3 + $0x60] sm:$0xff]
      %v610 = vld [vmem:[#allocation3 + $0x68] sm:$0xff]
      %v611 = vld [vmem:[#allocation3 + $0x70] sm:$0xff]
      %v612 = vld [vmem:[#allocation3 + $0x78] sm:$0xff]
      %613 = vmin.xlane.f32.xlu0 %v597
      %v614 = vpop.xlane.xlu0 %613
      %615 = vmin.xlane.f32.xlu0 %v598
      %v616 = vpop.xlane.xlu0 %615
      %617 = vmin.xlane.f32.xlu0 %v599
      %v618 = vpop.xlane.xlu0 %617
      %619 = vmin.xlane.f32.xlu0 %v600
      %v620 = vpop.xlane.xlu0 %619
      %621 = vmin.xlane.f32.xlu0 %v601
      %v622 = vpop.xlane.xlu0 %621
      %623 = vmin.xlane.f32.xlu0 %v602
      %v624 = vpop.xlane.xlu0 %623
      %625 = vmin.xlane.f32.xlu0 %v603
      %v626 = vpop.xlane.xlu0 %625
      %627 = vmin.xlane.f32.xlu0 %v604
      %v628 = vpop.xlane.xlu0 %627
      %629 = vmin.xlane.f32.xlu0 %v605
      %v630 = vpop.xlane.xlu0 %629
      %631 = vmin.xlane.f32.xlu0 %v606
      %v632 = vpop.xlane.xlu0 %631
      %633 = vmin.xlane.f32.xlu0 %v607
      %v634 = vpop.xlane.xlu0 %633
      %635 = vmin.xlane.f32.xlu0 %v608
      %v636 = vpop.xlane.xlu0 %635
      %637 = vmin.xlane.f32.xlu0 %v609
      %v638 = vpop.xlane.xlu0 %637
      %639 = vmin.xlane.f32.xlu0 %v610
      %v640 = vpop.xlane.xlu0 %639
      %641 = vmin.xlane.f32.xlu0 %v611
      %v642 = vpop.xlane.xlu0 %641
      %643 = vmin.xlane.f32.xlu0 %v612
      %v644 = vpop.xlane.xlu0 %643
      %v645 = vmul.f32 %v566, 2.0
      %v646 = vmul.f32 %v568, 2.0
      %v647 = vmul.f32 %v570, 2.0
      %v648 = vmul.f32 %v572, 2.0
      %v649 = vmul.f32 %v574, 2.0
      %v650 = vmul.f32 %v576, 2.0
      %v651 = vmul.f32 %v578, 2.0
      %v652 = vmul.f32 %v580, 2.0
      %v653 = vmul.f32 %v582, 2.0
      %v654 = vmul.f32 %v584, 2.0
      %v655 = vmul.f32 %v586, 2.0
      %v656 = vmul.f32 %v588, 2.0
      %v657 = vmul.f32 %v590, 2.0
      %v658 = vmul.f32 %v592, 2.0
      %v659 = vmul.f32 %v594, 2.0
      %v660 = vmul.f32 %v596, 2.0
      %v661 = vadd.f32 %v533, %v645
      %v662 = vadd.f32 %v534, %v646
      %v663 = vadd.f32 %v535, %v647
      %v664 = vadd.f32 %v536, %v648
      %v665 = vadd.f32 %v537, %v649
      %v666 = vadd.f32 %v538, %v650
      %v667 = vadd.f32 %v539, %v651
      %v668 = vadd.f32 %v540, %v652
      %v669 = vadd.f32 %v541, %v653
      %v670 = vadd.f32 %v542, %v654
      %v671 = vadd.f32 %v543, %v655
      %v672 = vadd.f32 %v544, %v656
      %v673 = vadd.f32 %v545, %v657
      %v674 = vadd.f32 %v546, %v658
      %v675 = vadd.f32 %v547, %v659
      %v676 = vadd.f32 %v548, %v660
      %v677 = vmax.f32 %v661, 1e-12
      %v678 = vmax.f32 %v662, 1e-12
      %v679 = vmax.f32 %v663, 1e-12
      %v680 = vmax.f32 %v664, 1e-12
      %v681 = vmax.f32 %v665, 1e-12
      %v682 = vmax.f32 %v666, 1e-12
      %v683 = vmax.f32 %v667, 1e-12
      %v684 = vmax.f32 %v668, 1e-12
      %v685 = vmax.f32 %v669, 1e-12
      %v686 = vmax.f32 %v670, 1e-12
      %v687 = vmax.f32 %v671, 1e-12
      %v688 = vmax.f32 %v672, 1e-12
      %v689 = vmax.f32 %v673, 1e-12
      %v690 = vmax.f32 %v674, 1e-12
      %v691 = vmax.f32 %v675, 1e-12
      %v692 = vmax.f32 %v676, 1e-12
      %v693 = vrsqrt.pop %v677
      %v694 = vmul.f32 %v677, %v693
      %vm695 = vcmp.eq.f32.partialorder %v677, inf
      %v696 = vsel %vm695, %v677, %v694
      %vm697 = vcmp.eq.f32.partialorder %v677, 0.0
      %v698 = vand.u32 %v677, 2147483648
      %v699 = vsel %vm697, %v698, %v696
      %v700 = vrsqrt.pop %v678
      %v701 = vmul.f32 %v678, %v700
      %vm702 = vcmp.eq.f32.partialorder %v678, inf
      %v703 = vsel %vm702, %v678, %v701
      %vm704 = vcmp.eq.f32.partialorder %v678, 0.0
      %v705 = vand.u32 %v678, 2147483648
      %v706 = vsel %vm704, %v705, %v703
      %v707 = vrsqrt.pop %v679
      %v708 = vmul.f32 %v679, %v707
      %vm709 = vcmp.eq.f32.partialorder %v679, inf
      %v710 = vsel %vm709, %v679, %v708
      %vm711 = vcmp.eq.f32.partialorder %v679, 0.0
      %v712 = vand.u32 %v679, 2147483648
      %v713 = vsel %vm711, %v712, %v710
      %v714 = vrsqrt.pop %v680
      %v715 = vmul.f32 %v680, %v714
      %vm716 = vcmp.eq.f32.partialorder %v680, inf
      %v717 = vsel %vm716, %v680, %v715
      %vm718 = vcmp.eq.f32.partialorder %v680, 0.0
      %v719 = vand.u32 %v680, 2147483648
      %v720 = vsel %vm718, %v719, %v717
      %v721 = vrsqrt.pop %v681
      %v722 = vmul.f32 %v681, %v721
      %vm723 = vcmp.eq.f32.partialorder %v681, inf
      %v724 = vsel %vm723, %v681, %v722
      %vm725 = vcmp.eq.f32.partialorder %v681, 0.0
      %v726 = vand.u32 %v681, 2147483648
      %v727 = vsel %vm725, %v726, %v724
      %v728 = vrsqrt.pop %v682
      %v729 = vmul.f32 %v682, %v728
      %vm730 = vcmp.eq.f32.partialorder %v682, inf
      %v731 = vsel %vm730, %v682, %v729
      %vm732 = vcmp.eq.f32.partialorder %v682, 0.0
      %v733 = vand.u32 %v682, 2147483648
      %v734 = vsel %vm732, %v733, %v731
      %v735 = vrsqrt.pop %v683
      %v736 = vmul.f32 %v683, %v735
      %vm737 = vcmp.eq.f32.partialorder %v683, inf
      %v738 = vsel %vm737, %v683, %v736
      %vm739 = vcmp.eq.f32.partialorder %v683, 0.0
      %v740 = vand.u32 %v683, 2147483648
      %v741 = vsel %vm739, %v740, %v738
      %v742 = vrsqrt.pop %v684
      %v743 = vmul.f32 %v684, %v742
      %vm744 = vcmp.eq.f32.partialorder %v684, inf
      %v745 = vsel %vm744, %v684, %v743
      %vm746 = vcmp.eq.f32.partialorder %v684, 0.0
      %v747 = vand.u32 %v684, 2147483648
      %v748 = vsel %vm746, %v747, %v745
      %v749 = vrsqrt.pop %v685
      %v750 = vmul.f32 %v685, %v749
      %vm751 = vcmp.eq.f32.partialorder %v685, inf
      %v752 = vsel %vm751, %v685, %v750
      %vm753 = vcmp.eq.f32.partialorder %v685, 0.0
      %v754 = vand.u32 %v685, 2147483648
      %v755 = vsel %vm753, %v754, %v752
      %v756 = vrsqrt.pop %v686
      %v757 = vmul.f32 %v686, %v756
      %vm758 = vcmp.eq.f32.partialorder %v686, inf
      %v759 = vsel %vm758, %v686, %v757
      %vm760 = vcmp.eq.f32.partialorder %v686, 0.0
      %v761 = vand.u32 %v686, 2147483648
      %v762 = vsel %vm760, %v761, %v759
      %v763 = vrsqrt.pop %v687
      %v764 = vmul.f32 %v687, %v763
      %vm765 = vcmp.eq.f32.partialorder %v687, inf
      %v766 = vsel %vm765, %v687, %v764
      %vm767 = vcmp.eq.f32.partialorder %v687, 0.0
      %v768 = vand.u32 %v687, 2147483648
      %v769 = vsel %vm767, %v768, %v766
      %v770 = vrsqrt.pop %v688
      %v771 = vmul.f32 %v688, %v770
      %vm772 = vcmp.eq.f32.partialorder %v688, inf
      %v773 = vsel %vm772, %v688, %v771
      %vm774 = vcmp.eq.f32.partialorder %v688, 0.0
      %v775 = vand.u32 %v688, 2147483648
      %v776 = vsel %vm774, %v775, %v773
      %v777 = vrsqrt.pop %v689
      %v778 = vmul.f32 %v689, %v777
      %vm779 = vcmp.eq.f32.partialorder %v689, inf
      %v780 = vsel %vm779, %v689, %v778
      %vm781 = vcmp.eq.f32.partialorder %v689, 0.0
      %v782 = vand.u32 %v689, 2147483648
      %v783 = vsel %vm781, %v782, %v780
      %v784 = vrsqrt.pop %v690
      %v785 = vmul.f32 %v690, %v784
      %vm786 = vcmp.eq.f32.partialorder %v690, inf
      %v787 = vsel %vm786, %v690, %v785
      %vm788 = vcmp.eq.f32.partialorder %v690, 0.0
      %v789 = vand.u32 %v690, 2147483648
      %v790 = vsel %vm788, %v789, %v787
      %v791 = vrsqrt.pop %v691
      %v792 = vmul.f32 %v691, %v791
      %vm793 = vcmp.eq.f32.partialorder %v691, inf
      %v794 = vsel %vm793, %v691, %v792
      %vm795 = vcmp.eq.f32.partialorder %v691, 0.0
      %v796 = vand.u32 %v691, 2147483648
      %v797 = vsel %vm795, %v796, %v794
      %v798 = vrsqrt.pop %v692
      %v799 = vmul.f32 %v692, %v798
      %vm800 = vcmp.eq.f32.partialorder %v692, inf
      %v801 = vsel %vm800, %v692, %v799
      %vm802 = vcmp.eq.f32.partialorder %v692, 0.0
      %v803 = vand.u32 %v692, 2147483648
      %v804 = vsel %vm802, %v803, %v801
      %v805 = vmul.f32 %v614, 2.0
      %v806 = vmul.f32 %v616, 2.0
      %v807 = vmul.f32 %v618, 2.0
      %v808 = vmul.f32 %v620, 2.0
      %v809 = vmul.f32 %v622, 2.0
      %v810 = vmul.f32 %v624, 2.0
      %v811 = vmul.f32 %v626, 2.0
      %v812 = vmul.f32 %v628, 2.0
      %v813 = vmul.f32 %v630, 2.0
      %v814 = vmul.f32 %v632, 2.0
      %v815 = vmul.f32 %v634, 2.0
      %v816 = vmul.f32 %v636, 2.0
      %v817 = vmul.f32 %v638, 2.0
      %v818 = vmul.f32 %v640, 2.0
      %v819 = vmul.f32 %v642, 2.0
      %v820 = vmul.f32 %v644, 2.0
      %v821 = vadd.f32 %v533, %v805
      %v822 = vadd.f32 %v534, %v806
      %v823 = vadd.f32 %v535, %v807
      %v824 = vadd.f32 %v536, %v808
      %v825 = vadd.f32 %v537, %v809
      %v826 = vadd.f32 %v538, %v810
      %v827 = vadd.f32 %v539, %v811
      %v828 = vadd.f32 %v540, %v812
      %v829 = vadd.f32 %v541, %v813
      %v830 = vadd.f32 %v542, %v814
      %v831 = vadd.f32 %v543, %v815
      %v832 = vadd.f32 %v544, %v816
      %v833 = vadd.f32 %v545, %v817
      %v834 = vadd.f32 %v546, %v818
      %v835 = vadd.f32 %v547, %v819
      %v836 = vadd.f32 %v548, %v820
      %v837 = vmax.f32 %v821, 1e-12
      %v838 = vmax.f32 %v822, 1e-12
      %v839 = vmax.f32 %v823, 1e-12
      %v840 = vmax.f32 %v824, 1e-12
      %v841 = vmax.f32 %v825, 1e-12
      %v842 = vmax.f32 %v826, 1e-12
      %v843 = vmax.f32 %v827, 1e-12
      %v844 = vmax.f32 %v828, 1e-12
      %v845 = vmax.f32 %v829, 1e-12
      %v846 = vmax.f32 %v830, 1e-12
      %v847 = vmax.f32 %v831, 1e-12
      %v848 = vmax.f32 %v832, 1e-12
      %v849 = vmax.f32 %v833, 1e-12
      %v850 = vmax.f32 %v834, 1e-12
      %v851 = vmax.f32 %v835, 1e-12
      %v852 = vmax.f32 %v836, 1e-12
      %v853 = vrsqrt.pop %v837
      %v854 = vmul.f32 %v837, %v853
      %vm855 = vcmp.eq.f32.partialorder %v837, inf
      %v856 = vsel %vm855, %v837, %v854
      %vm857 = vcmp.eq.f32.partialorder %v837, 0.0
      %v858 = vand.u32 %v837, 2147483648
      %v859 = vsel %vm857, %v858, %v856
      %v860 = vrsqrt.pop %v838
      %v861 = vmul.f32 %v838, %v860
      %vm862 = vcmp.eq.f32.partialorder %v838, inf
      %v863 = vsel %vm862, %v838, %v861
      %vm864 = vcmp.eq.f32.partialorder %v838, 0.0
      %v865 = vand.u32 %v838, 2147483648
      %v866 = vsel %vm864, %v865, %v863
      %v867 = vrsqrt.pop %v839
      %v868 = vmul.f32 %v839, %v867
      %vm869 = vcmp.eq.f32.partialorder %v839, inf
      %v870 = vsel %vm869, %v839, %v868
      %vm871 = vcmp.eq.f32.partialorder %v839, 0.0
      %v872 = vand.u32 %v839, 2147483648
      %v873 = vsel %vm871, %v872, %v870
      %v874 = vrsqrt.pop %v840
      %v875 = vmul.f32 %v840, %v874
      %vm876 = vcmp.eq.f32.partialorder %v840, inf
      %v877 = vsel %vm876, %v840, %v875
      %vm878 = vcmp.eq.f32.partialorder %v840, 0.0
      %v879 = vand.u32 %v840, 2147483648
      %v880 = vsel %vm878, %v879, %v877
      %v881 = vrsqrt.pop %v841
      %v882 = vmul.f32 %v841, %v881
      %vm883 = vcmp.eq.f32.partialorder %v841, inf
      %v884 = vsel %vm883, %v841, %v882
      %vm885 = vcmp.eq.f32.partialorder %v841, 0.0
      %v886 = vand.u32 %v841, 2147483648
      %v887 = vsel %vm885, %v886, %v884
      %v888 = vrsqrt.pop %v842
      %v889 = vmul.f32 %v842, %v888
      %vm890 = vcmp.eq.f32.partialorder %v842, inf
      %v891 = vsel %vm890, %v842, %v889
      %vm892 = vcmp.eq.f32.partialorder %v842, 0.0
      %v893 = vand.u32 %v842, 2147483648
      %v894 = vsel %vm892, %v893, %v891
      %v895 = vrsqrt.pop %v843
      %v896 = vmul.f32 %v843, %v895
      %vm897 = vcmp.eq.f32.partialorder %v843, inf
      %v898 = vsel %vm897, %v843, %v896
      %vm899 = vcmp.eq.f32.partialorder %v843, 0.0
      %v900 = vand.u32 %v843, 2147483648
      %v901 = vsel %vm899, %v900, %v898
      %v902 = vrsqrt.pop %v844
      %v903 = vmul.f32 %v844, %v902
      %vm904 = vcmp.eq.f32.partialorder %v844, inf
      %v905 = vsel %vm904, %v844, %v903
      %vm906 = vcmp.eq.f32.partialorder %v844, 0.0
      %v907 = vand.u32 %v844, 2147483648
      %v908 = vsel %vm906, %v907, %v905
      %v909 = vrsqrt.pop %v845
      %v910 = vmul.f32 %v845, %v909
      %vm911 = vcmp.eq.f32.partialorder %v845, inf
      %v912 = vsel %vm911, %v845, %v910
      %vm913 = vcmp.eq.f32.partialorder %v845, 0.0
      %v914 = vand.u32 %v845, 2147483648
      %v915 = vsel %vm913, %v914, %v912
      %v916 = vrsqrt.pop %v846
      %v917 = vmul.f32 %v846, %v916
      %vm918 = vcmp.eq.f32.partialorder %v846, inf
      %v919 = vsel %vm918, %v846, %v917
      %vm920 = vcmp.eq.f32.partialorder %v846, 0.0
      %v921 = vand.u32 %v846, 2147483648
      %v922 = vsel %vm920, %v921, %v919
      %v923 = vrsqrt.pop %v847
      %v924 = vmul.f32 %v847, %v923
      %vm925 = vcmp.eq.f32.partialorder %v847, inf
      %v926 = vsel %vm925, %v847, %v924
      %vm927 = vcmp.eq.f32.partialorder %v847, 0.0
      %v928 = vand.u32 %v847, 2147483648
      %v929 = vsel %vm927, %v928, %v926
      %v930 = vrsqrt.pop %v848
      %v931 = vmul.f32 %v848, %v930
      %vm932 = vcmp.eq.f32.partialorder %v848, inf
      %v933 = vsel %vm932, %v848, %v931
      %vm934 = vcmp.eq.f32.partialorder %v848, 0.0
      %v935 = vand.u32 %v848, 2147483648
      %v936 = vsel %vm934, %v935, %v933
      %v937 = vrsqrt.pop %v849
      %v938 = vmul.f32 %v849, %v937
      %vm939 = vcmp.eq.f32.partialorder %v849, inf
      %v940 = vsel %vm939, %v849, %v938
      %vm941 = vcmp.eq.f32.partialorder %v849, 0.0
      %v942 = vand.u32 %v849, 2147483648
      %v943 = vsel %vm941, %v942, %v940
      %v944 = vrsqrt.pop %v850
      %v945 = vmul.f32 %v850, %v944
      %vm946 = vcmp.eq.f32.partialorder %v850, inf
      %v947 = vsel %vm946, %v850, %v945
      %vm948 = vcmp.eq.f32.partialorder %v850, 0.0
      %v949 = vand.u32 %v850, 2147483648
      %v950 = vsel %vm948, %v949, %v947
      %v951 = vrsqrt.pop %v851
      %v952 = vmul.f32 %v851, %v951
      %vm953 = vcmp.eq.f32.partialorder %v851, inf
      %v954 = vsel %vm953, %v851, %v952
      %vm955 = vcmp.eq.f32.partialorder %v851, 0.0
      %v956 = vand.u32 %v851, 2147483648
      %v957 = vsel %vm955, %v956, %v954
      %v958 = vrsqrt.pop %v852
      %v959 = vmul.f32 %v852, %v958
      %vm960 = vcmp.eq.f32.partialorder %v852, inf
      %v961 = vsel %vm960, %v852, %v959
      %vm962 = vcmp.eq.f32.partialorder %v852, 0.0
      %v963 = vand.u32 %v852, 2147483648
      %v964 = vsel %vm962, %v963, %v961
      %v965 = vsub.f32 %v699, %v859
      %v966 = vsub.f32 %v706, %v866
      %v967 = vsub.f32 %v713, %v873
      %v968 = vsub.f32 %v720, %v880
      %v969 = vsub.f32 %v727, %v887
      %v970 = vsub.f32 %v734, %v894
      %v971 = vsub.f32 %v741, %v901
      %v972 = vsub.f32 %v748, %v908
      %v973 = vsub.f32 %v755, %v915
      %v974 = vsub.f32 %v762, %v922
      %v975 = vsub.f32 %v769, %v929
      %v976 = vsub.f32 %v776, %v936
      %v977 = vsub.f32 %v783, %v943
      %v978 = vsub.f32 %v790, %v950
      %v979 = vsub.f32 %v797, %v957
      %v980 = vsub.f32 %v804, %v964
      %v981 = vadd.f32 %v965, 0.3
      %v982 = vadd.f32 %v966, 0.3
      %v983 = vadd.f32 %v967, 0.3
      %v984 = vadd.f32 %v968, 0.3
      %v985 = vadd.f32 %v969, 0.3
      %v986 = vadd.f32 %v970, 0.3
      %v987 = vadd.f32 %v971, 0.3
      %v988 = vadd.f32 %v972, 0.3
      %v989 = vadd.f32 %v973, 0.3
      %v990 = vadd.f32 %v974, 0.3
      %v991 = vadd.f32 %v975, 0.3
      %v992 = vadd.f32 %v976, 0.3
      %v993 = vadd.f32 %v977, 0.3
      %v994 = vadd.f32 %v978, 0.3
      %v995 = vadd.f32 %v979, 0.3
      %v996 = vadd.f32 %v980, 0.3
      %v997 = vmax.f32 %v981, 0.0
      %v998 = vmax.f32 %v982, 0.0
      %v999 = vmax.f32 %v983, 0.0
      %v1000 = vmax.f32 %v984, 0.0
      %v1001 = vmax.f32 %v985, 0.0
      %v1002 = vmax.f32 %v986, 0.0
      %v1003 = vmax.f32 %v987, 0.0
      %v1004 = vmax.f32 %v988, 0.0
      %v1005 = vmax.f32 %v989, 0.0
      %v1006 = vmax.f32 %v990, 0.0
      %v1007 = vmax.f32 %v991, 0.0
      %v1008 = vmax.f32 %v992, 0.0
      %v1009 = vmax.f32 %v993, 0.0
      %v1010 = vmax.f32 %v994, 0.0
      %v1011 = vmax.f32 %v995, 0.0
      %v1012 = vmax.f32 %v996, 0.0
      %v1013 = vlaneseq
      %v1014 = vshrl.u32 %v1013, 7
      %v1015 = vadd.s32 %v1014, 8
      %v1016 = vadd.s32 %v1014, 16
      %v1017 = vadd.s32 %v1014, 24
      %v1018 = vadd.s32 %v1014, 32
      %v1019 = vadd.s32 %v1014, 40
      %v1020 = vadd.s32 %v1014, 48
      %v1021 = vadd.s32 %v1014, 56
      %v1022 = vadd.s32 %v1014, 64
      %v1023 = vadd.s32 %v1014, 72
      %v1024 = vadd.s32 %v1014, 80
      %v1025 = vadd.s32 %v1014, 88
      %v1026 = vadd.s32 %v1014, 96
      %v1027 = vadd.s32 %v1014, 104
      %v1028 = vadd.s32 %v1014, 112
      %v1029 = vadd.s32 %v1014, 120
      %s1030 = smul.u32 0, 128
      %v1031 = vstv %s1030
      %v1032 = vadd.s32 %v1014, %v1031
      %v1033 = vadd.s32 %v1015, %v1031
      %v1034 = vadd.s32 %v1016, %v1031
      %v1035 = vadd.s32 %v1017, %v1031
      %v1036 = vadd.s32 %v1018, %v1031
      %v1037 = vadd.s32 %v1019, %v1031
      %v1038 = vadd.s32 %v1020, %v1031
      %v1039 = vadd.s32 %v1021, %v1031
      %v1040 = vadd.s32 %v1022, %v1031
      %v1041 = vadd.s32 %v1023, %v1031
      %v1042 = vadd.s32 %v1024, %v1031
      %v1043 = vadd.s32 %v1025, %v1031
      %v1044 = vadd.s32 %v1026, %v1031
      %v1045 = vadd.s32 %v1027, %v1031
      %v1046 = vadd.s32 %v1028, %v1031
      %v1047 = vadd.s32 %v1029, %v1031
      %vm1048 = vcmp.lt.s32.totalorder %v1032, 8
      %vm1049 = vcmp.lt.s32.totalorder %v1033, 8
      %vm1050 = vcmp.lt.s32.totalorder %v1034, 8
      %vm1051 = vcmp.lt.s32.totalorder %v1035, 8
      %vm1052 = vcmp.lt.s32.totalorder %v1036, 8
      %vm1053 = vcmp.lt.s32.totalorder %v1037, 8
      %vm1054 = vcmp.lt.s32.totalorder %v1038, 8
      %vm1055 = vcmp.lt.s32.totalorder %v1039, 8
      %vm1056 = vcmp.lt.s32.totalorder %v1040, 8
      %vm1057 = vcmp.lt.s32.totalorder %v1041, 8
      %vm1058 = vcmp.lt.s32.totalorder %v1042, 8
      %vm1059 = vcmp.lt.s32.totalorder %v1043, 8
      %vm1060 = vcmp.lt.s32.totalorder %v1044, 8
      %vm1061 = vcmp.lt.s32.totalorder %v1045, 8
      %vm1062 = vcmp.lt.s32.totalorder %v1046, 8
      %vm1063 = vcmp.lt.s32.totalorder %v1047, 8
      %v1064 = vsel %vm1048, %v997, 0.0
      %v1065 = vsel %vm1049, %v998, 0.0
      %v1066 = vsel %vm1050, %v999, 0.0
      %v1067 = vsel %vm1051, %v1000, 0.0
      %v1068 = vsel %vm1052, %v1001, 0.0
      %v1069 = vsel %vm1053, %v1002, 0.0
      %v1070 = vsel %vm1054, %v1003, 0.0
      %v1071 = vsel %vm1055, %v1004, 0.0
      %v1072 = vsel %vm1056, %v1005, 0.0
      %v1073 = vsel %vm1057, %v1006, 0.0
      %v1074 = vsel %vm1058, %v1007, 0.0
      %v1075 = vsel %vm1059, %v1008, 0.0
      %v1076 = vsel %vm1060, %v1009, 0.0
      %v1077 = vsel %vm1061, %v1010, 0.0
      %v1078 = vsel %vm1062, %v1011, 0.0
      %v1079 = vsel %vm1063, %v1012, 0.0
      %vm1080 = vcmask 7168
      %v1081 = vsel %vm1080, %v1064, 0.0
      %v1082 = vsel %vm1080, %v1065, 0.0
      %v1083 = vadd.f32 %v1081, %v1082
      %v1084 = vsel %vm1080, %v1066, 0.0
      %v1085 = vadd.f32 %v1083, %v1084
      %v1086 = vsel %vm1080, %v1067, 0.0
      %v1087 = vadd.f32 %v1085, %v1086
      %v1088 = vsel %vm1080, %v1068, 0.0
      %v1089 = vadd.f32 %v1087, %v1088
      %v1090 = vsel %vm1080, %v1069, 0.0
      %v1091 = vadd.f32 %v1089, %v1090
      %v1092 = vsel %vm1080, %v1070, 0.0
      %v1093 = vadd.f32 %v1091, %v1092
      %v1094 = vsel %vm1080, %v1071, 0.0
      %v1095 = vadd.f32 %v1093, %v1094
      %v1096 = vsel %vm1080, %v1072, 0.0
      %v1097 = vadd.f32 %v1095, %v1096
      %v1098 = vsel %vm1080, %v1073, 0.0
      %v1099 = vadd.f32 %v1097, %v1098
      %v1100 = vsel %vm1080, %v1074, 0.0
      %v1101 = vadd.f32 %v1099, %v1100
      %v1102 = vsel %vm1080, %v1075, 0.0
      %v1103 = vadd.f32 %v1101, %v1102
      %v1104 = vsel %vm1080, %v1076, 0.0
      %v1105 = vadd.f32 %v1103, %v1104
      %v1106 = vsel %vm1080, %v1077, 0.0
      %v1107 = vadd.f32 %v1105, %v1106
      %v1108 = vsel %vm1080, %v1078, 0.0
      %v1109 = vadd.f32 %v1107, %v1108
      %v1110 = vsel %vm1080, %v1079, 0.0
      %v1111 = vadd.f32 %v1109, %v1110
      %1112 = vadd.xlane.f32.xlu0 %v1111
      %v1113 = vpop.xlane.xlu0 %1112
      %v1114 = vrot.slane %v1113, 4
      %v1115 = vadd.f32 %v1113, %v1114
      %v1116 = vrot.slane %v1115, 2
      %v1117 = vadd.f32 %v1115, %v1116
      %v1118 = vrot.slane %v1117, 1
      %v1119 = vadd.f32 %v1117, %v1118
      %s1120 = vtos %v1119
      %v1121 = vstv %s1120
      %1122 = vst [vmem:[#allocation4] sm:$0xff] %v1121
    $region33: #{tpu_custom_call.1} parent=1 // pred_fallthru
      _
    // Predicated region
    $region34: #{tpu_custom_call.1} parent=1 // pred_check
      _
    $region35: #{tpu_custom_call.1} parent=1 // pred_check_branch
      %1124 = sbr.rel (0) target = $region37
    $region36: #{tpu_custom_call.1} parent=1 // pred_region
      %s1126 = ssub.s32 128, 128
      %1127 = vsyncadd [#allocation5], %s1126
      %s1129 = sshll.u32 [#allocation4], 4
      %s1130 = int_to_ptr.vmem [resolvable:$true] %s1129
      %1132 = dma.vmem_to_hbm [thread:$0]  %s1130, 128, %s6, [#allocation5]
    $region37: #{tpu_custom_call.1} parent=1 // pred_fallthru
      _
    // Predicated region
    $region38: #{tpu_custom_call.1} parent=1 // pred_check
      _
    $region39: #{tpu_custom_call.1} parent=1 // pred_check_branch
      %1134 = sbr.rel (0) target = $region41
    $region40: #{tpu_custom_call.1} parent=1 // pred_region
      %1135 = dma.done [#allocation5], 128
    $region41: #{tpu_custom_call.1} parent=1 // pred_fallthru
      _
    %1136 = vsyncpa [#allocation5], 1

</llo_original>
